<compile_context>
chip_gen: v5e
topology: v5e:2x2
jax: 0.10.0
libtpu: 0.0.40
codegen_flags: <defaults>
</compile_context>

<pallas_src>
import jax
import jax.numpy as jnp
import numpy as np
from jax.experimental import pallas as pl
from jax.experimental.pallas import tpu as pltpu


def gcn_conv1_kernel(a_ref, x_ref, w1_ref, b1_ref, w2_ref, z_ref):
    """Per row-tile: z = relu((A_tile @ X) @ W1 + b1) @ W2."""
    # Aggregate first: [TM, N] x [N, F] is far cheaper than [TM, N] x [N, H].
    ax = jnp.dot(a_ref[...], x_ref[...], preferred_element_type=jnp.float32)
    h1 = jnp.dot(ax, w1_ref[...], preferred_element_type=jnp.float32) + b1_ref[...]
    h1 = jnp.maximum(h1, 0.0)
    # conv2 transform-first (H >> out_dim), aggregation happens in kernel 2.
    z_ref[...] = jnp.dot(h1, w2_ref[...],
                         preferred_element_type=jnp.float32).astype(z_ref.dtype)


def gcn_conv2_kernel(a_ref, z_ref, b2_ref, o_ref):
    """Per row-tile: out = A_tile @ z + b2 (natural [TM, out_dim] layout)."""
    o_ref[...] = (jnp.dot(a_ref[...], z_ref[...],
                          preferred_element_type=jnp.float32)
                  + b2_ref[...]).astype(o_ref.dtype)


def _full_spec(shape):
    # whole-array block, same block for every grid step (stays VMEM resident)
    return pl.BlockSpec(shape, lambda i: tuple(0 for _ in shape))


def gcn_forward_pallas(a_hat, x, w1, b1, w2, b2, *, tm=None):
    n, _ = x.shape
    out_dim = w2.shape[1]
    if tm is None:
        tm = n if n <= 128 else 128
    assert n % tm == 0 and (tm == n or tm % 8 == 0), (n, tm)
    grid = (n // tm,)

    a_row_spec = pl.BlockSpec((tm, n), lambda i: (i, 0))
    out_row_spec = pl.BlockSpec((tm, out_dim), lambda i: (i, 0))
    cparams = pltpu.CompilerParams(dimension_semantics=("parallel",),
                                   vmem_limit_bytes=8 << 20)

    # Stage 1: z = relu((A_hat @ X) @ W1 + b1) @ W2   (row-tiled, parallel)
    z = pl.pallas_call(
        gcn_conv1_kernel,
        out_shape=jax.ShapeDtypeStruct((n, out_dim), jnp.float32),
        grid=grid,
        in_specs=[a_row_spec, _full_spec(x.shape), _full_spec(w1.shape),
                  _full_spec(b1.shape), _full_spec(w2.shape)],
        out_specs=out_row_spec,
        compiler_params=cparams,
    )(a_hat, x, w1, b1, w2)

    # Stage 2: out = A_hat @ z + b2                    (row-tiled, parallel)
    out_nd = pl.pallas_call(
        gcn_conv2_kernel,
        out_shape=jax.ShapeDtypeStruct((n, out_dim), jnp.float32),
        grid=grid,
        in_specs=[a_row_spec, _full_spec((n, out_dim)), _full_spec(b2.shape)],
        out_specs=out_row_spec,
        compiler_params=cparams,
    )(a_hat, z, b2)

    # x.t() of the module: wrapper-side transpose (free layout plumbing),
    # keeps in-kernel stores in the natural lane layout.
    return out_nd.T


def build_norm_adj(edge_index, num_nodes):
    """Dense D^{-1/2}(A+I)D^{-1/2} from edge_index [2, E] (PyG gcn_norm)."""
    src = edge_index[0]
    dst = edge_index[1]
    a = jnp.zeros((num_nodes, num_nodes), jnp.float32)
    # scatter-ADD like PyG (duplicate edges count towards weight/degree)
    a = a.at[dst, src].add(1.0)
    a = a + jnp.eye(num_nodes, dtype=jnp.float32)   # add_self_loops, fill=1
    deg = a.sum(axis=1)
    dinv = jnp.where(deg > 0, jax.lax.rsqrt(deg), 0.0)
    return dinv[:, None] * a * dinv[None, :]


def glorot(key, shape):
    fan_in, fan_out = shape
    scale = jnp.sqrt(6.0 / (fan_in + fan_out))
    return jax.random.uniform(key, shape, jnp.float32, -scale, scale)


def reference_forward(a_hat, x, w1, b1, w2, b2):
    # PyTorch/PyG computation order.
    h1 = jnp.maximum(a_hat @ (x @ w1) + b1, 0.0)
    h2 = a_hat @ (h1 @ w2) + b2
    return h2.T


if __name__ == "__main__":
    # module __init__ shapes: conv1: dim_sim -> 1024, conv2: 1024 -> out_dim
    N, DIM_SIM, HIDDEN, OUT_DIM = 16, 32, 1024, 8

    key = jax.random.PRNGKey(0)
    kx, ke1, ke2, kw1, kw2 = jax.random.split(key, 5)

    # node features
    x = jax.random.normal(kx, (N, DIM_SIM), jnp.float32)

    # random undirected edges without self-loops, edge_index: [2, E]
    num_edges = 40
    src = jax.random.randint(ke1, (num_edges,), 0, N)
    dst = (src + 1 + jax.random.randint(ke2, (num_edges,), 0, N - 1)) % N
    edge_index = jnp.stack([jnp.concatenate([src, dst]),
                            jnp.concatenate([dst, src])]).astype(jnp.int32)

    # deterministic parameter init (glorot weights, zero biases as in PyG)
    w1 = glorot(kw1, (DIM_SIM, HIDDEN))
    b1 = jnp.zeros((1, HIDDEN), jnp.float32)
    w2 = glorot(kw2, (HIDDEN, OUT_DIM))
    b2 = jnp.zeros((1, OUT_DIM), jnp.float32)

    a_hat = build_norm_adj(edge_index, N)

    # tm=8 exercises a real 2-step row-parallel grid at this toy size.
    out = gcn_forward_pallas(a_hat, x, w1, b1, w2, b2, tm=8)
    out = jax.block_until_ready(out)

    ref = reference_forward(a_hat, x, w1, b1, w2, b2)
    assert out.shape == (OUT_DIM, N), out.shape
    np.testing.assert_allclose(np.asarray(out), np.asarray(ref),
                               rtol=1e-4, atol=1e-4)

    print("KERNEL_OK")
</pallas_src>

<mosaic_0001>
module attributes {stable_mosaic.version = 11 : i64} {
  func.func @gcn_conv1_kernel(%arg0: i32, %arg1: memref<8x16xf32, #tpu.memory_space<vmem>>, %arg2: memref<16x32xf32, #tpu.memory_space<vmem>>, %arg3: memref<32x1024xf32, #tpu.memory_space<vmem>>, %arg4: memref<1x1024xf32, #tpu.memory_space<vmem>>, %arg5: memref<1024x8xf32, #tpu.memory_space<vmem>>, %arg6: memref<8x8xf32, #tpu.memory_space<vmem>>) attributes {dimension_semantics = [#tpu.dimension_semantics<parallel>], iteration_bounds = array<i64: 2>, scalar_prefetch = 0 : i64, scratch_operands = 0 : i64, tpu.core_type = #tpu.core_type<tc>, window_params = [{transform_indices = @transform_0, window_bounds = array<i64: 8, 16>}, {pipeline_mode = #tpu.pipeline_mode<synchronous>, transform_indices = @transform_1, window_bounds = array<i64: 16, 32>}, {pipeline_mode = #tpu.pipeline_mode<synchronous>, transform_indices = @transform_2, window_bounds = array<i64: 32, 1024>}, {pipeline_mode = #tpu.pipeline_mode<synchronous>, transform_indices = @transform_3, window_bounds = array<i64: 1, 1024>}, {pipeline_mode = #tpu.pipeline_mode<synchronous>, transform_indices = @transform_4, window_bounds = array<i64: 1024, 8>}, {transform_indices = @transform_5, window_bounds = array<i64: 8, 8>}]} {
    %c0 = arith.constant 0 : index
    %c0_0 = arith.constant 0 : index
    %0 = vector.load %arg1[%c0, %c0_0] : memref<8x16xf32, #tpu.memory_space<vmem>>, vector<8x16xf32>
    %c0_1 = arith.constant 0 : index
    %c0_2 = arith.constant 0 : index
    %1 = vector.load %arg2[%c0_1, %c0_2] : memref<16x32xf32, #tpu.memory_space<vmem>>, vector<16x32xf32>
    %cst = arith.constant dense<0.000000e+00> : vector<8x32xf32>
    %2 = tpu.matmul %0, %1, %cst {dimension_numbers = #tpu.dot_dimension_numbers<[1], [0], [0], [1], [0, 0, 1, 1], [], []>} : vector<8x16xf32>, vector<16x32xf32>, vector<8x32xf32> -> vector<8x32xf32>
    %c0_3 = arith.constant 0 : index
    %c0_4 = arith.constant 0 : index
    %3 = vector.load %arg3[%c0_3, %c0_4] : memref<32x1024xf32, #tpu.memory_space<vmem>>, vector<32x1024xf32>
    %cst_5 = arith.constant dense<0.000000e+00> : vector<8x1024xf32>
    %4 = tpu.matmul %2, %3, %cst_5 {dimension_numbers = #tpu.dot_dimension_numbers<[1], [0], [0], [1], [0, 0, 1, 1], [], []>} : vector<8x32xf32>, vector<32x1024xf32>, vector<8x1024xf32> -> vector<8x1024xf32>
    %c0_6 = arith.constant 0 : index
    %c0_7 = arith.constant 0 : index
    %5 = vector.load %arg4[%c0_6, %c0_7] : memref<1x1024xf32, #tpu.memory_space<vmem>>, vector<1x1024xf32>
    %6 = vector.broadcast %5 : vector<1x1024xf32> to vector<8x1024xf32>
    %7 = arith.addf %4, %6 : vector<8x1024xf32>
    %cst_8 = arith.constant 0.000000e+00 : f32
    %8 = vector.broadcast %cst_8 : f32 to vector<8x1024xf32>
    %9 = arith.maximumf %7, %8 : vector<8x1024xf32>
    %c0_9 = arith.constant 0 : index
    %c0_10 = arith.constant 0 : index
    %10 = vector.load %arg5[%c0_9, %c0_10] : memref<1024x8xf32, #tpu.memory_space<vmem>>, vector<1024x8xf32>
    %cst_11 = arith.constant dense<0.000000e+00> : vector<8x8xf32>
    %11 = tpu.matmul %9, %10, %cst_11 {dimension_numbers = #tpu.dot_dimension_numbers<[1], [0], [0], [1], [0, 0, 1, 1], [], []>} : vector<8x1024xf32>, vector<1024x8xf32>, vector<8x8xf32> -> vector<8x8xf32>
    %c0_12 = arith.constant 0 : index
    %c0_13 = arith.constant 0 : index
    %12 = vector.load %arg6[%c0_12, %c0_13] : memref<8x8xf32, #tpu.memory_space<vmem>>, vector<8x8xf32>
    tpu.vector_store %arg6[%c0_12, %c0_13], %11 {strides = array<i32>} : memref<8x8xf32, #tpu.memory_space<vmem>>, vector<8x8xf32>,
    return
  }
  func.func @transform_0(%arg0: i32) -> (i32, i32) {
    %c0_i32 = arith.constant 0 : i32
    %c0_i32_0 = arith.constant 0 : i32
    return %arg0, %c0_i32 : i32, i32
  }
  func.func @transform_1(%arg0: i32) -> (i32, i32) {
    %c0_i32 = arith.constant 0 : i32
    %c0_i32_0 = arith.constant 0 : i32
    %c0_i32_1 = arith.constant 0 : i32
    return %c0_i32, %c0_i32_0 : i32, i32
  }
  func.func @transform_2(%arg0: i32) -> (i32, i32) {
    %c0_i32 = arith.constant 0 : i32
    %c0_i32_0 = arith.constant 0 : i32
    %c0_i32_1 = arith.constant 0 : i32
    return %c0_i32, %c0_i32_0 : i32, i32
  }
  func.func @transform_3(%arg0: i32) -> (i32, i32) {
    %c0_i32 = arith.constant 0 : i32
    %c0_i32_0 = arith.constant 0 : i32
    %c0_i32_1 = arith.constant 0 : i32
    return %c0_i32, %c0_i32_0 : i32, i32
  }
  func.func @transform_4(%arg0: i32) -> (i32, i32) {
    %c0_i32 = arith.constant 0 : i32
    %c0_i32_0 = arith.constant 0 : i32
    %c0_i32_1 = arith.constant 0 : i32
    return %c0_i32, %c0_i32_0 : i32, i32
  }
  func.func @transform_5(%arg0: i32) -> (i32, i32) {
    %c0_i32 = arith.constant 0 : i32
    %c0_i32_0 = arith.constant 0 : i32
    return %arg0, %c0_i32 : i32, i32
  }
}

</mosaic_0001>

<llo_original>
// kernel: tpu_custom_call.1
$region0: #{tpu_custom_call.1}
  #allocation0 [shape = 'u32[]', space=smem, size = 0x4, offset = 0x4, fixed_abs, tag = 'smem constant byte address 0x4 - core index']
  #allocation1 [shape = 'u32[72,128]{1,0:T(1,128)}', space=vmem, size = 0x9000, scoped, tag = 'internal scratch']
  %s0 = inlined_call_operand.vmem [shape: f32[16,16], index: 0, kind: input, shape index: {}]
  %s1 = inlined_call_operand.vmem [shape: f32[16,32], index: 1, kind: input, shape index: {}]
  %s2 = inlined_call_operand.vmem [shape: f32[32,1024], index: 2, kind: input, shape index: {}]
  %s3 = inlined_call_operand.vmem [shape: f32[1,1024], index: 3, kind: input, shape index: {}]
  %s4 = inlined_call_operand.vmem [shape: f32[1024,8], index: 4, kind: input, shape index: {}]
  %s5 = inlined_call_operand.vmem [shape: f32[16,8], index: 5, kind: output, shape index: {}]
  %s6 = sld [smem:[#allocation0]]
  $region53: #{tpu_custom_call.1} parent=0
    _
  %s8 = ssub.s32 1, %s6
  %s9 = scalar_select 0, %s8, %s6
  loop: start=0, step=1, limit=4
  $region2: #{tpu_custom_call.1} parent=0 // loop_pre_header
    _
  $region3: #{tpu_custom_call.1} parent=0 // loop_header
    %s11 = sphi 0, %s15
    %p12 = scmp.ge.s32.totalorder %s11, 4
    %s21 = sphi 0, %s23
    %s24 = sphi 0, %s21
    %s25 = sphi 0, %s24
    %s41 = sphi 0, %s25
    %s45 = sphi 0, %s45
    %s47 = sphi 0, %s45
    %s48 = sphi 0, %s47
    %s62 = sphi 0, %s48
    %s66 = sphi 0, %s66
    %s68 = sphi 0, %s66
    %s69 = sphi 0, %s68
    %s83 = sphi 0, %s69
    %s87 = sphi 0, %s87
    %s89 = sphi 0, %s87
    %s90 = sphi 0, %s89
    %s104 = sphi 0, %s90
    %s108 = sphi 0, %s108
    %s110 = sphi 0, %s108
    %s111 = sphi 0, %s110
    %s125 = sphi 0, %s111
    %s131 = sphi 0, %s133
    %s134 = sphi 0, %s131
    %s135 = sphi 0, %s134
    %s151 = sphi 0, %s135
  $region4: #{tpu_custom_call.1} parent=0 // loop_header_branch
    %14 = sbr.rel (%p12) target = $region8
  $region5: #{tpu_custom_call.1} parent=0 // loop_body
    %s16 = ssub.s32 %s11, 1
    %s17 = ssub.s32 %s11, 2
    %s18 = sadd.s32 %s11, 1
    %s19 = ssub.s32 %s11, %s18
    %p20 = scmp.eq.s32.totalorder %s19, 0
    %s22 = sadd.s32 %s21, 1
    %s23 = scalar_select %p20, %s21, %s22
    %p26 = pneg %p20
    %p27 = scmp.eq.s32.totalorder %s11, 1
    %p28 = por %p26, %p27
    %p29 = scmp.ne.s32.totalorder %s21, %s24
    %p30 = scmp.eq.s32.totalorder %s11, 0
    %p31 = por %p29, %p30
    %p32 = scmp.ne.s32.totalorder %s21, %s24
    %p33 = scmp.eq.s32.totalorder %s16, 1
    %p34 = por %p32, %p33
    %p35 = scmp.ne.s32.totalorder %s24, %s25
    %p36 = scmp.eq.s32.totalorder %s16, 0
    %p37 = por %p35, %p36
    %p38 = scmp.ne.s32.totalorder %s24, %s25
    %p39 = scmp.eq.s32.totalorder %s17, 1
    %p40 = por %p38, %p39
    %p42 = scmp.ne.s32.totalorder %s25, %s41
    %p43 = scmp.eq.s32.totalorder %s17, 0
    %p44 = por %p42, %p43
    %s46 = sadd.s32 %s45, 1
    %p49 = scmp.eq.s32.totalorder %s11, 1
    %p50 = scmp.ne.s32.totalorder %s45, %s47
    %p51 = scmp.eq.s32.totalorder %s11, 0
    %p52 = por %p50, %p51
    %p53 = scmp.ne.s32.totalorder %s45, %s47
    %p54 = scmp.eq.s32.totalorder %s16, 1
    %p55 = por %p53, %p54
    %p56 = scmp.ne.s32.totalorder %s47, %s48
    %p57 = scmp.eq.s32.totalorder %s16, 0
    %p58 = por %p56, %p57
    %p59 = scmp.ne.s32.totalorder %s47, %s48
    %p60 = scmp.eq.s32.totalorder %s17, 1
    %p61 = por %p59, %p60
    %p63 = scmp.ne.s32.totalorder %s48, %s62
    %p64 = scmp.eq.s32.totalorder %s17, 0
    %p65 = por %p63, %p64
    %s67 = sadd.s32 %s66, 1
    %p70 = scmp.eq.s32.totalorder %s11, 1
    %p71 = scmp.ne.s32.totalorder %s66, %s68
    %p72 = scmp.eq.s32.totalorder %s11, 0
    %p73 = por %p71, %p72
    %p74 = scmp.ne.s32.totalorder %s66, %s68
    %p75 = scmp.eq.s32.totalorder %s16, 1
    %p76 = por %p74, %p75
    %p77 = scmp.ne.s32.totalorder %s68, %s69
    %p78 = scmp.eq.s32.totalorder %s16, 0
    %p79 = por %p77, %p78
    %p80 = scmp.ne.s32.totalorder %s68, %s69
    %p81 = scmp.eq.s32.totalorder %s17, 1
    %p82 = por %p80, %p81
    %p84 = scmp.ne.s32.totalorder %s69, %s83
    %p85 = scmp.eq.s32.totalorder %s17, 0
    %p86 = por %p84, %p85
    %s88 = sadd.s32 %s87, 1
    %p91 = scmp.eq.s32.totalorder %s11, 1
    %p92 = scmp.ne.s32.totalorder %s87, %s89
    %p93 = scmp.eq.s32.totalorder %s11, 0
    %p94 = por %p92, %p93
    %p95 = scmp.ne.s32.totalorder %s87, %s89
    %p96 = scmp.eq.s32.totalorder %s16, 1
    %p97 = por %p95, %p96
    %p98 = scmp.ne.s32.totalorder %s89, %s90
    %p99 = scmp.eq.s32.totalorder %s16, 0
    %p100 = por %p98, %p99
    %p101 = scmp.ne.s32.totalorder %s89, %s90
    %p102 = scmp.eq.s32.totalorder %s17, 1
    %p103 = por %p101, %p102
    %p105 = scmp.ne.s32.totalorder %s90, %s104
    %p106 = scmp.eq.s32.totalorder %s17, 0
    %p107 = por %p105, %p106
    %s109 = sadd.s32 %s108, 1
    %p112 = scmp.eq.s32.totalorder %s11, 1
    %p113 = scmp.ne.s32.totalorder %s108, %s110
    %p114 = scmp.eq.s32.totalorder %s11, 0
    %p115 = por %p113, %p114
    %p116 = scmp.ne.s32.totalorder %s108, %s110
    %p117 = scmp.eq.s32.totalorder %s16, 1
    %p118 = por %p116, %p117
    %p119 = scmp.ne.s32.totalorder %s110, %s111
    %p120 = scmp.eq.s32.totalorder %s16, 0
    %p121 = por %p119, %p120
    %p122 = scmp.ne.s32.totalorder %s110, %s111
    %p123 = scmp.eq.s32.totalorder %s17, 1
    %p124 = por %p122, %p123
    %p126 = scmp.ne.s32.totalorder %s111, %s125
    %p127 = scmp.eq.s32.totalorder %s17, 0
    %p128 = por %p126, %p127
    %s129 = ssub.s32 %s11, %s18
    %p130 = scmp.eq.s32.totalorder %s129, 0
    %s132 = sadd.s32 %s131, 1
    %s133 = scalar_select %p130, %s131, %s132
    %p136 = pneg %p130
    %p137 = scmp.eq.s32.totalorder %s11, 1
    %p138 = por %p136, %p137
    %p139 = scmp.ne.s32.totalorder %s131, %s134
    %p140 = scmp.eq.s32.totalorder %s11, 0
    %p141 = por %p139, %p140
    %p142 = scmp.ne.s32.totalorder %s131, %s134
    %p143 = scmp.eq.s32.totalorder %s16, 1
    %p144 = por %p142, %p143
    %p145 = scmp.ne.s32.totalorder %s134, %s135
    %p146 = scmp.eq.s32.totalorder %s16, 0
    %p147 = por %p145, %p146
    %p148 = scmp.ne.s32.totalorder %s134, %s135
    %p149 = scmp.eq.s32.totalorder %s17, 1
    %p150 = por %p148, %p149
    %p152 = scmp.ne.s32.totalorder %s135, %s151
    %p153 = scmp.eq.s32.totalorder %s17, 0
    %p154 = por %p152, %p153
    %p155 = scmp.le.s32.totalorder 1, %s11
    %p156 = scmp.lt.s32.totalorder %s11, 3
    %p157 = pnand %p155, %p156
    %p158 = pneg %p157
    // Predicated region
    $region9: #{tpu_custom_call.1} parent=5 // pred_check
      _
    $region10: #{tpu_custom_call.1} parent=5 // pred_check_branch
      %160 = sbr.rel (%p157) target = $region12
    $region11: #{tpu_custom_call.1} parent=5 // pred_region
      %s161 = ssub.s32 %s11, 1
      // Predicated region
      $region13: #{tpu_custom_call.1} parent=11 // pred_check
        %p162 = pneg %p58
      $region14: #{tpu_custom_call.1} parent=11 // pred_check_branch
        %164 = sbr.rel (%p162) target = $region16
      $region15: #{tpu_custom_call.1} parent=11 // pred_region
        _
      $region16: #{tpu_custom_call.1} parent=11 // pred_fallthru
        _
      // Predicated region
      $region17: #{tpu_custom_call.1} parent=11 // pred_check
        %p165 = pneg %p79
      $region18: #{tpu_custom_call.1} parent=11 // pred_check_branch
        %167 = sbr.rel (%p165) target = $region20
      $region19: #{tpu_custom_call.1} parent=11 // pred_region
        _
      $region20: #{tpu_custom_call.1} parent=11 // pred_fallthru
        _
      // Predicated region
      $region21: #{tpu_custom_call.1} parent=11 // pred_check
        %p168 = pneg %p100
      $region22: #{tpu_custom_call.1} parent=11 // pred_check_branch
        %170 = sbr.rel (%p168) target = $region24
      $region23: #{tpu_custom_call.1} parent=11 // pred_region
        _
      $region24: #{tpu_custom_call.1} parent=11 // pred_fallthru
        _
      // Predicated region
      $region25: #{tpu_custom_call.1} parent=11 // pred_check
        %p171 = pneg %p121
      $region26: #{tpu_custom_call.1} parent=11 // pred_check_branch
        %173 = sbr.rel (%p171) target = $region28
      $region27: #{tpu_custom_call.1} parent=11 // pred_region
        _
      $region28: #{tpu_custom_call.1} parent=11 // pred_fallthru
        _
    $region12: #{tpu_custom_call.1} parent=5 // pred_fallthru
      _
    %p174 = scmp.lt.s32.totalorder %s11, 2
    // Predicated region
    $region29: #{tpu_custom_call.1} parent=5 // pred_check
      %p175 = pneg %p174
    $region30: #{tpu_custom_call.1} parent=5 // pred_check_branch
      %177 = sbr.rel (%p175) target = $region32
    $region31: #{tpu_custom_call.1} parent=5 // pred_region
      // Predicated region
      $region33: #{tpu_custom_call.1} parent=31 // pred_check
        %p178 = pneg %p31
      $region34: #{tpu_custom_call.1} parent=31 // pred_check_branch
        %180 = sbr.rel (%p178) target = $region36
      $region35: #{tpu_custom_call.1} parent=31 // pred_region
        %p181 = scmp.lt.s32.totalorder %s11, 1
        %s182 = scalar_select %p181, %s11, 1
        %s183 = smul.addr %s182, 8
        %s184 = scalar_lea.vmem %s0, %s183
      $region36: #{tpu_custom_call.1} parent=31 // pred_fallthru
        _
    $region32: #{tpu_custom_call.1} parent=5 // pred_fallthru
      _
    %p185 = scmp.le.s32.totalorder 1, %s11
    %p186 = scmp.lt.s32.totalorder %s11, 3
    %p187 = pnand %p185, %p186
    %p188 = pneg %p187
    // Predicated region
    $region37: #{tpu_custom_call.1} parent=5 // pred_check
      _
    $region38: #{tpu_custom_call.1} parent=5 // pred_check_branch
      %190 = sbr.rel (%p187) target = $region40
    $region39: #{tpu_custom_call.1} parent=5 // pred_region
      %s191 = ssub.s32 %s11, 1
      %p192 = scmp.lt.s32.totalorder %s16, 1
      %s193 = scalar_select %p192, %s16, 1
      %s194 = smul.addr %s193, 8
      %s195 = scalar_lea.vmem %s0, %s194
      %p196 = pneg %p37
      %p197 = pneg %p34
      %p198 = pneg %p58
      %p199 = pneg %p55
      %p200 = pneg %p79
      %p201 = pneg %p76
      %p202 = pneg %p100
      %p203 = pneg %p97
      %p204 = pneg %p121
      %p205 = pneg %p118
      %p206 = pneg %p147
      %p207 = pneg %p144
      %p208 = scmp.lt.s32.totalorder %s16, 1
      %s209 = scalar_select %p208, %s16, 1
      %s210 = smul.addr %s209, 8
      %s211 = scalar_lea.vmem %s5, %s210
      %p212 = scmp.lt.s32.totalorder %s16, 1
      %s213 = scalar_select %p212, %s16, 1
      %s214 = smul.addr %s213, 8
      %s215 = scalar_lea.vmem %s0, %s214
      %p216 = scmp.lt.s32.totalorder %s16, 1
      %s217 = scalar_select %p216, %s16, 1
      %s218 = smul.addr %s217, 8
      %s219 = scalar_lea.vmem %s5, %s218
      %v220 = vld [vmem:[%s215] sm:$0xff]
      %v221 = vld [vmem:[%s1] sm:$0xff]
      %v222 = vld [vmem:[%s1 + $0x8] sm:$0xff]
      %vm223 = vcmask 130048
      %v225 = vsel %vm223, %v220, 0
      %227 = vmatpush.msra.mxu0 0.0
      %228 = vmatpush.msra.mxu0 0.0
      %229 = vmatpush.msra.mxu0 0.0
      %230 = vmatpush.msra.mxu0 0.0
      %231 = vmatpush.msra.mxu0 0.0
      %232 = vmatpush.msra.mxu0 0.0
      %233 = vmatpush.msra.mxu0 0.0
      %234 = vmatpush.msra.mxu0 0.0
      %235 = vmatpush.msra.mxu0 0.0
      %236 = vmatpush.msra.mxu0 0.0
      %237 = vmatpush.msra.mxu0 0.0
      %238 = vmatpush.msra.mxu0 0.0
      %239 = vmatpush.msra.mxu0 0.0
      %240 = vmatpush.msra.mxu0 0.0
      %241 = vmatpush.msra.mxu0 %v222
      %242 = vmatpush.msra.mxu0 %v221
      %243 = vmatmul.f32.gmra.mxu0 %v225
      %v244 = vpop.f32.mrf.mxu0
      %v245 = vadd.f32 0.0, %v244
      %246 = vdwg.mxu0
      %v247 = vld [vmem:[%s2] sm:$0xff]
      %v248 = vld [vmem:[%s2 + $0x8] sm:$0xff]
      %v249 = vld [vmem:[%s2 + $0x10] sm:$0xff]
      %v250 = vld [vmem:[%s2 + $0x18] sm:$0xff]
      %v251 = vld [vmem:[%s2 + $0x20] sm:$0xff]
      %v252 = vld [vmem:[%s2 + $0x28] sm:$0xff]
      %v253 = vld [vmem:[%s2 + $0x30] sm:$0xff]
      %v254 = vld [vmem:[%s2 + $0x38] sm:$0xff]
      %v255 = vld [vmem:[%s2 + $0x40] sm:$0xff]
      %v256 = vld [vmem:[%s2 + $0x48] sm:$0xff]
      %v257 = vld [vmem:[%s2 + $0x50] sm:$0xff]
      %v258 = vld [vmem:[%s2 + $0x58] sm:$0xff]
      %v259 = vld [vmem:[%s2 + $0x60] sm:$0xff]
      %v260 = vld [vmem:[%s2 + $0x68] sm:$0xff]
      %v261 = vld [vmem:[%s2 + $0x70] sm:$0xff]
      %v262 = vld [vmem:[%s2 + $0x78] sm:$0xff]
      %v263 = vld [vmem:[%s2 + $0x80] sm:$0xff]
      %v264 = vld [vmem:[%s2 + $0x88] sm:$0xff]
      %v265 = vld [vmem:[%s2 + $0x90] sm:$0xff]
      %v266 = vld [vmem:[%s2 + $0x98] sm:$0xff]
      %v267 = vld [vmem:[%s2 + $0xa0] sm:$0xff]
      %v268 = vld [vmem:[%s2 + $0xa8] sm:$0xff]
      %v269 = vld [vmem:[%s2 + $0xb0] sm:$0xff]
      %v270 = vld [vmem:[%s2 + $0xb8] sm:$0xff]
      %v271 = vld [vmem:[%s2 + $0xc0] sm:$0xff]
      %v272 = vld [vmem:[%s2 + $0xc8] sm:$0xff]
      %v273 = vld [vmem:[%s2 + $0xd0] sm:$0xff]
      %v274 = vld [vmem:[%s2 + $0xd8] sm:$0xff]
      %v275 = vld [vmem:[%s2 + $0xe0] sm:$0xff]
      %v276 = vld [vmem:[%s2 + $0xe8] sm:$0xff]
      %v277 = vld [vmem:[%s2 + $0xf0] sm:$0xff]
      %v278 = vld [vmem:[%s2 + $0xf8] sm:$0xff]
      %v279 = vld [vmem:[%s3] sm:$0xff]
      %v281 = vperm.slane %v279, 0
      %v282 = vperm.slane %v279, 1
      %v283 = vperm.slane %v279, 2
      %v284 = vperm.slane %v279, 3
      %v285 = vperm.slane %v279, 4
      %v286 = vperm.slane %v279, 5
      %v287 = vperm.slane %v279, 6
      %v288 = vperm.slane %v279, 7
      %vm297 = vcmask 261120
      %v299 = vsel %vm297, %v245, 0
      %301 = vmatpush.msra.mxu0 0.0
      %302 = vmatpush.msra.mxu0 0.0
      %303 = vmatpush.msra.mxu0 0.0
      %304 = vmatpush.msra.mxu0 0.0
      %305 = vmatpush.msra.mxu0 0.0
      %306 = vmatpush.msra.mxu0 0.0
      %307 = vmatpush.msra.mxu0 0.0
      %308 = vmatpush.msra.mxu0 0.0
      %309 = vmatpush.msra.mxu0 0.0
      %310 = vmatpush.msra.mxu0 0.0
      %311 = vmatpush.msra.mxu0 0.0
      %312 = vmatpush.msra.mxu0 0.0
      %313 = vmatpush.msra.mxu0 %v271
      %314 = vmatpush.msra.mxu0 %v263
      %315 = vmatpush.msra.mxu0 %v255
      %316 = vmatpush.msra.mxu0 %v247
      %317 = vmatmul.f32.gmra.mxu0 %v299
      %v318 = vpop.f32.mrf.mxu0
      %v319 = vadd.f32 %v281, %v318
      %320 = vdwg.mxu0
      %321 = vmatpush.msra.mxu0 0.0
      %322 = vmatpush.msra.mxu0 0.0
      %323 = vmatpush.msra.mxu0 0.0
      %324 = vmatpush.msra.mxu0 0.0
      %325 = vmatpush.msra.mxu0 0.0
      %326 = vmatpush.msra.mxu0 0.0
      %327 = vmatpush.msra.mxu0 0.0
      %328 = vmatpush.msra.mxu0 0.0
      %329 = vmatpush.msra.mxu0 0.0
      %330 = vmatpush.msra.mxu0 0.0
      %331 = vmatpush.msra.mxu0 0.0
      %332 = vmatpush.msra.mxu0 0.0
      %333 = vmatpush.msra.mxu0 %v272
      %334 = vmatpush.msra.mxu0 %v264
      %335 = vmatpush.msra.mxu0 %v256
      %336 = vmatpush.msra.mxu0 %v248
      %337 = vmatmul.f32.gmra.mxu0 %v299
      %v338 = vpop.f32.mrf.mxu0
      %v339 = vadd.f32 %v282, %v338
      %340 = vdwg.mxu0
      %341 = vmatpush.msra.mxu0 0.0
      %342 = vmatpush.msra.mxu0 0.0
      %343 = vmatpush.msra.mxu0 0.0
      %344 = vmatpush.msra.mxu0 0.0
      %345 = vmatpush.msra.mxu0 0.0
      %346 = vmatpush.msra.mxu0 0.0
      %347 = vmatpush.msra.mxu0 0.0
      %348 = vmatpush.msra.mxu0 0.0
      %349 = vmatpush.msra.mxu0 0.0
      %350 = vmatpush.msra.mxu0 0.0
      %351 = vmatpush.msra.mxu0 0.0
      %352 = vmatpush.msra.mxu0 0.0
      %353 = vmatpush.msra.mxu0 %v273
      %354 = vmatpush.msra.mxu0 %v265
      %355 = vmatpush.msra.mxu0 %v257
      %356 = vmatpush.msra.mxu0 %v249
      %357 = vmatmul.f32.gmra.mxu0 %v299
      %v358 = vpop.f32.mrf.mxu0
      %v359 = vadd.f32 %v283, %v358
      %360 = vdwg.mxu0
      %361 = vmatpush.msra.mxu0 0.0
      %362 = vmatpush.msra.mxu0 0.0
      %363 = vmatpush.msra.mxu0 0.0
      %364 = vmatpush.msra.mxu0 0.0
      %365 = vmatpush.msra.mxu0 0.0
      %366 = vmatpush.msra.mxu0 0.0
      %367 = vmatpush.msra.mxu0 0.0
      %368 = vmatpush.msra.mxu0 0.0
      %369 = vmatpush.msra.mxu0 0.0
      %370 = vmatpush.msra.mxu0 0.0
      %371 = vmatpush.msra.mxu0 0.0
      %372 = vmatpush.msra.mxu0 0.0
      %373 = vmatpush.msra.mxu0 %v274
      %374 = vmatpush.msra.mxu0 %v266
      %375 = vmatpush.msra.mxu0 %v258
      %376 = vmatpush.msra.mxu0 %v250
      %377 = vmatmul.f32.gmra.mxu0 %v299
      %v378 = vpop.f32.mrf.mxu0
      %v379 = vadd.f32 %v284, %v378
      %380 = vdwg.mxu0
      %381 = vmatpush.msra.mxu0 0.0
      %382 = vmatpush.msra.mxu0 0.0
      %383 = vmatpush.msra.mxu0 0.0
      %384 = vmatpush.msra.mxu0 0.0
      %385 = vmatpush.msra.mxu0 0.0
      %386 = vmatpush.msra.mxu0 0.0
      %387 = vmatpush.msra.mxu0 0.0
      %388 = vmatpush.msra.mxu0 0.0
      %389 = vmatpush.msra.mxu0 0.0
      %390 = vmatpush.msra.mxu0 0.0
      %391 = vmatpush.msra.mxu0 0.0
      %392 = vmatpush.msra.mxu0 0.0
      %393 = vmatpush.msra.mxu0 %v275
      %394 = vmatpush.msra.mxu0 %v267
      %395 = vmatpush.msra.mxu0 %v259
      %396 = vmatpush.msra.mxu0 %v251
      %397 = vmatmul.f32.gmra.mxu0 %v299
      %v398 = vpop.f32.mrf.mxu0
      %v399 = vadd.f32 %v285, %v398
      %400 = vdwg.mxu0
      %401 = vmatpush.msra.mxu0 0.0
      %402 = vmatpush.msra.mxu0 0.0
      %403 = vmatpush.msra.mxu0 0.0
      %404 = vmatpush.msra.mxu0 0.0
      %405 = vmatpush.msra.mxu0 0.0
      %406 = vmatpush.msra.mxu0 0.0
      %407 = vmatpush.msra.mxu0 0.0
      %408 = vmatpush.msra.mxu0 0.0
      %409 = vmatpush.msra.mxu0 0.0
      %410 = vmatpush.msra.mxu0 0.0
      %411 = vmatpush.msra.mxu0 0.0
      %412 = vmatpush.msra.mxu0 0.0
      %413 = vmatpush.msra.mxu0 %v276
      %414 = vmatpush.msra.mxu0 %v268
      %415 = vmatpush.msra.mxu0 %v260
      %416 = vmatpush.msra.mxu0 %v252
      %417 = vmatmul.f32.gmra.mxu0 %v299
      %v418 = vpop.f32.mrf.mxu0
      %v419 = vadd.f32 %v286, %v418
      %420 = vdwg.mxu0
      %421 = vmatpush.msra.mxu0 0.0
      %422 = vmatpush.msra.mxu0 0.0
      %423 = vmatpush.msra.mxu0 0.0
      %424 = vmatpush.msra.mxu0 0.0
      %425 = vmatpush.msra.mxu0 0.0
      %426 = vmatpush.msra.mxu0 0.0
      %427 = vmatpush.msra.mxu0 0.0
      %428 = vmatpush.msra.mxu0 0.0
      %429 = vmatpush.msra.mxu0 0.0
      %430 = vmatpush.msra.mxu0 0.0
      %431 = vmatpush.msra.mxu0 0.0
      %432 = vmatpush.msra.mxu0 0.0
      %433 = vmatpush.msra.mxu0 %v277
      %434 = vmatpush.msra.mxu0 %v269
      %435 = vmatpush.msra.mxu0 %v261
      %436 = vmatpush.msra.mxu0 %v253
      %437 = vmatmul.f32.gmra.mxu0 %v299
      %v438 = vpop.f32.mrf.mxu0
      %v439 = vadd.f32 %v287, %v438
      %440 = vdwg.mxu0
      %441 = vmatpush.msra.mxu0 0.0
      %442 = vmatpush.msra.mxu0 0.0
      %443 = vmatpush.msra.mxu0 0.0
      %444 = vmatpush.msra.mxu0 0.0
      %445 = vmatpush.msra.mxu0 0.0
      %446 = vmatpush.msra.mxu0 0.0
      %447 = vmatpush.msra.mxu0 0.0
      %448 = vmatpush.msra.mxu0 0.0
      %449 = vmatpush.msra.mxu0 0.0
      %450 = vmatpush.msra.mxu0 0.0
      %451 = vmatpush.msra.mxu0 0.0
      %452 = vmatpush.msra.mxu0 0.0
      %453 = vmatpush.msra.mxu0 %v278
      %454 = vmatpush.msra.mxu0 %v270
      %455 = vmatpush.msra.mxu0 %v262
      %456 = vmatpush.msra.mxu0 %v254
      %457 = vmatmul.f32.gmra.mxu0 %v299
      %v458 = vpop.f32.mrf.mxu0
      %v459 = vadd.f32 %v288, %v458
      %460 = vdwg.mxu0
      %v461 = vmax.f32 %v319, 0.0
      %v462 = vmax.f32 %v339, 0.0
      %v463 = vmax.f32 %v359, 0.0
      %v464 = vmax.f32 %v379, 0.0
      %v465 = vmax.f32 %v399, 0.0
      %v466 = vmax.f32 %v419, 0.0
      %v467 = vmax.f32 %v439, 0.0
      %v468 = vmax.f32 %v459, 0.0
      %v469 = vld [vmem:[%s4] sm:$0xff]
      %v470 = vld [vmem:[%s4 + $0x8] sm:$0xff]
      %v471 = vld [vmem:[%s4 + $0x10] sm:$0xff]
      %v472 = vld [vmem:[%s4 + $0x18] sm:$0xff]
      %v473 = vld [vmem:[%s4 + $0x20] sm:$0xff]
      %v474 = vld [vmem:[%s4 + $0x28] sm:$0xff]
      %v475 = vld [vmem:[%s4 + $0x30] sm:$0xff]
      %v476 = vld [vmem:[%s4 + $0x38] sm:$0xff]
      %v477 = vld [vmem:[%s4 + $0x40] sm:$0xff]
      %v478 = vld [vmem:[%s4 + $0x48] sm:$0xff]
      %v479 = vld [vmem:[%s4 + $0x50] sm:$0xff]
      %v480 = vld [vmem:[%s4 + $0x58] sm:$0xff]
      %v481 = vld [vmem:[%s4 + $0x60] sm:$0xff]
      %v482 = vld [vmem:[%s4 + $0x68] sm:$0xff]
      %v483 = vld [vmem:[%s4 + $0x70] sm:$0xff]
      %v484 = vld [vmem:[%s4 + $0x78] sm:$0xff]
      %v485 = vld [vmem:[%s4 + $0x80] sm:$0xff]
      %v486 = vld [vmem:[%s4 + $0x88] sm:$0xff]
      %v487 = vld [vmem:[%s4 + $0x90] sm:$0xff]
      %v488 = vld [vmem:[%s4 + $0x98] sm:$0xff]
      %v489 = vld [vmem:[%s4 + $0xa0] sm:$0xff]
      %v490 = vld [vmem:[%s4 + $0xa8] sm:$0xff]
      %v491 = vld [vmem:[%s4 + $0xb0] sm:$0xff]
      %v492 = vld [vmem:[%s4 + $0xb8] sm:$0xff]
      %v493 = vld [vmem:[%s4 + $0xc0] sm:$0xff]
      %v494 = vld [vmem:[%s4 + $0xc8] sm:$0xff]
      %v495 = vld [vmem:[%s4 + $0xd0] sm:$0xff]
      %v496 = vld [vmem:[%s4 + $0xd8] sm:$0xff]
      %v497 = vld [vmem:[%s4 + $0xe0] sm:$0xff]
      %v498 = vld [vmem:[%s4 + $0xe8] sm:$0xff]
      %v499 = vld [vmem:[%s4 + $0xf0] sm:$0xff]
      %v500 = vld [vmem:[%s4 + $0xf8] sm:$0xff]
      %v501 = vld [vmem:[%s4 + $0x100] sm:$0xff]
      %v502 = vld [vmem:[%s4 + $0x108] sm:$0xff]
      %v503 = vld [vmem:[%s4 + $0x110] sm:$0xff]
      %v504 = vld [vmem:[%s4 + $0x118] sm:$0xff]
      %v505 = vld [vmem:[%s4 + $0x120] sm:$0xff]
      %v506 = vld [vmem:[%s4 + $0x128] sm:$0xff]
      %v507 = vld [vmem:[%s4 + $0x130] sm:$0xff]
      %v508 = vld [vmem:[%s4 + $0x138] sm:$0xff]
      %v509 = vld [vmem:[%s4 + $0x140] sm:$0xff]
      %v510 = vld [vmem:[%s4 + $0x148] sm:$0xff]
      %v511 = vld [vmem:[%s4 + $0x150] sm:$0xff]
      %v512 = vld [vmem:[%s4 + $0x158] sm:$0xff]
      %v513 = vld [vmem:[%s4 + $0x160] sm:$0xff]
      %v514 = vld [vmem:[%s4 + $0x168] sm:$0xff]
      %v515 = vld [vmem:[%s4 + $0x170] sm:$0xff]
      %v516 = vld [vmem:[%s4 + $0x178] sm:$0xff]
      %v517 = vld [vmem:[%s4 + $0x180] sm:$0xff]
      %v518 = vld [vmem:[%s4 + $0x188] sm:$0xff]
      %v519 = vld [vmem:[%s4 + $0x190] sm:$0xff]
      %v520 = vld [vmem:[%s4 + $0x198] sm:$0xff]
      %v521 = vld [vmem:[%s4 + $0x1a0] sm:$0xff]
      %v522 = vld [vmem:[%s4 + $0x1a8] sm:$0xff]
      %v523 = vld [vmem:[%s4 + $0x1b0] sm:$0xff]
      %v524 = vld [vmem:[%s4 + $0x1b8] sm:$0xff]
      %v525 = vld [vmem:[%s4 + $0x1c0] sm:$0xff]
      %v526 = vld [vmem:[%s4 + $0x1c8] sm:$0xff]
      %v527 = vld [vmem:[%s4 + $0x1d0] sm:$0xff]
      %v528 = vld [vmem:[%s4 + $0x1d8] sm:$0xff]
      %v529 = vld [vmem:[%s4 + $0x1e0] sm:$0xff]
      %v530 = vld [vmem:[%s4 + $0x1e8] sm:$0xff]
      %v531 = vld [vmem:[%s4 + $0x1f0] sm:$0xff]
      %v532 = vld [vmem:[%s4 + $0x1f8] sm:$0xff]
      %v533 = vld [vmem:[%s4 + $0x200] sm:$0xff]
      %v534 = vld [vmem:[%s4 + $0x208] sm:$0xff]
      %v535 = vld [vmem:[%s4 + $0x210] sm:$0xff]
      %v536 = vld [vmem:[%s4 + $0x218] sm:$0xff]
      %v537 = vld [vmem:[%s4 + $0x220] sm:$0xff]
      %v538 = vld [vmem:[%s4 + $0x228] sm:$0xff]
      %v539 = vld [vmem:[%s4 + $0x230] sm:$0xff]
      %v540 = vld [vmem:[%s4 + $0x238] sm:$0xff]
      %v541 = vld [vmem:[%s4 + $0x240] sm:$0xff]
      %v542 = vld [vmem:[%s4 + $0x248] sm:$0xff]
      %v543 = vld [vmem:[%s4 + $0x250] sm:$0xff]
      %v544 = vld [vmem:[%s4 + $0x258] sm:$0xff]
      %v545 = vld [vmem:[%s4 + $0x260] sm:$0xff]
      %v546 = vld [vmem:[%s4 + $0x268] sm:$0xff]
      %v547 = vld [vmem:[%s4 + $0x270] sm:$0xff]
      %v548 = vld [vmem:[%s4 + $0x278] sm:$0xff]
      %v549 = vld [vmem:[%s4 + $0x280] sm:$0xff]
      %v550 = vld [vmem:[%s4 + $0x288] sm:$0xff]
      %v551 = vld [vmem:[%s4 + $0x290] sm:$0xff]
      %v552 = vld [vmem:[%s4 + $0x298] sm:$0xff]
      %v553 = vld [vmem:[%s4 + $0x2a0] sm:$0xff]
      %v554 = vld [vmem:[%s4 + $0x2a8] sm:$0xff]
      %v555 = vld [vmem:[%s4 + $0x2b0] sm:$0xff]
      %v556 = vld [vmem:[%s4 + $0x2b8] sm:$0xff]
      %v557 = vld [vmem:[%s4 + $0x2c0] sm:$0xff]
      %v558 = vld [vmem:[%s4 + $0x2c8] sm:$0xff]
      %v559 = vld [vmem:[%s4 + $0x2d0] sm:$0xff]
      %v560 = vld [vmem:[%s4 + $0x2d8] sm:$0xff]
      %v561 = vld [vmem:[%s4 + $0x2e0] sm:$0xff]
      %v562 = vld [vmem:[%s4 + $0x2e8] sm:$0xff]
      %v563 = vld [vmem:[%s4 + $0x2f0] sm:$0xff]
      %v564 = vld [vmem:[%s4 + $0x2f8] sm:$0xff]
      %v565 = vld [vmem:[%s4 + $0x300] sm:$0xff]
      %v566 = vld [vmem:[%s4 + $0x308] sm:$0xff]
      %v567 = vld [vmem:[%s4 + $0x310] sm:$0xff]
      %v568 = vld [vmem:[%s4 + $0x318] sm:$0xff]
      %v569 = vld [vmem:[%s4 + $0x320] sm:$0xff]
      %v570 = vld [vmem:[%s4 + $0x328] sm:$0xff]
      %v571 = vld [vmem:[%s4 + $0x330] sm:$0xff]
      %v572 = vld [vmem:[%s4 + $0x338] sm:$0xff]
      %v573 = vld [vmem:[%s4 + $0x340] sm:$0xff]
      %v574 = vld [vmem:[%s4 + $0x348] sm:$0xff]
      %v575 = vld [vmem:[%s4 + $0x350] sm:$0xff]
      %v576 = vld [vmem:[%s4 + $0x358] sm:$0xff]
      %v577 = vld [vmem:[%s4 + $0x360] sm:$0xff]
      %v578 = vld [vmem:[%s4 + $0x368] sm:$0xff]
      %v579 = vld [vmem:[%s4 + $0x370] sm:$0xff]
      %v580 = vld [vmem:[%s4 + $0x378] sm:$0xff]
      %v581 = vld [vmem:[%s4 + $0x380] sm:$0xff]
      %v582 = vld [vmem:[%s4 + $0x388] sm:$0xff]
      %v583 = vld [vmem:[%s4 + $0x390] sm:$0xff]
      %v584 = vld [vmem:[%s4 + $0x398] sm:$0xff]
      %v585 = vld [vmem:[%s4 + $0x3a0] sm:$0xff]
      %v586 = vld [vmem:[%s4 + $0x3a8] sm:$0xff]
      %v587 = vld [vmem:[%s4 + $0x3b0] sm:$0xff]
      %v588 = vld [vmem:[%s4 + $0x3b8] sm:$0xff]
      %v589 = vld [vmem:[%s4 + $0x3c0] sm:$0xff]
      %v590 = vld [vmem:[%s4 + $0x3c8] sm:$0xff]
      %v591 = vld [vmem:[%s4 + $0x3d0] sm:$0xff]
      %v592 = vld [vmem:[%s4 + $0x3d8] sm:$0xff]
      %v593 = vld [vmem:[%s4 + $0x3e0] sm:$0xff]
      %v594 = vld [vmem:[%s4 + $0x3e8] sm:$0xff]
      %v595 = vld [vmem:[%s4 + $0x3f0] sm:$0xff]
      %v596 = vld [vmem:[%s4 + $0x3f8] sm:$0xff]
      %597 = vmatpush.msra.mxu0 %v484
      %598 = vmatpush.msra.mxu0 %v483
      %599 = vmatpush.msra.mxu0 %v482
      %600 = vmatpush.msra.mxu0 %v481
      %601 = vmatpush.msra.mxu0 %v480
      %602 = vmatpush.msra.mxu0 %v479
      %603 = vmatpush.msra.mxu0 %v478
      %604 = vmatpush.msra.mxu0 %v477
      %605 = vmatpush.msra.mxu0 %v476
      %606 = vmatpush.msra.mxu0 %v475
      %607 = vmatpush.msra.mxu0 %v474
      %608 = vmatpush.msra.mxu0 %v473
      %609 = vmatpush.msra.mxu0 %v472
      %610 = vmatpush.msra.mxu0 %v471
      %611 = vmatpush.msra.mxu0 %v470
      %612 = vmatpush.msra.mxu0 %v469
      %613 = vmatmul.f32.gmra.mxu0 %v461
      %v614 = vpop.f32.mrf.mxu0
      %v615 = vadd.f32 0.0, %v614
      %616 = vdwg.mxu0
      %617 = vmatpush.msra.mxu0 %v500
      %618 = vmatpush.msra.mxu0 %v499
      %619 = vmatpush.msra.mxu0 %v498
      %620 = vmatpush.msra.mxu0 %v497
      %621 = vmatpush.msra.mxu0 %v496
      %622 = vmatpush.msra.mxu0 %v495
      %623 = vmatpush.msra.mxu0 %v494
      %624 = vmatpush.msra.mxu0 %v493
      %625 = vmatpush.msra.mxu0 %v492
      %626 = vmatpush.msra.mxu0 %v491
      %627 = vmatpush.msra.mxu0 %v490
      %628 = vmatpush.msra.mxu0 %v489
      %629 = vmatpush.msra.mxu0 %v488
      %630 = vmatpush.msra.mxu0 %v487
      %631 = vmatpush.msra.mxu0 %v486
      %632 = vmatpush.msra.mxu0 %v485
      %633 = vmatmul.f32.gmra.mxu0 %v462
      %v634 = vpop.f32.mrf.mxu0
      %v635 = vadd.f32 %v615, %v634
      %636 = vdwg.mxu0
      %637 = vmatpush.msra.mxu0 %v516
      %638 = vmatpush.msra.mxu0 %v515
      %639 = vmatpush.msra.mxu0 %v514
      %640 = vmatpush.msra.mxu0 %v513
      %641 = vmatpush.msra.mxu0 %v512
      %642 = vmatpush.msra.mxu0 %v511
      %643 = vmatpush.msra.mxu0 %v510
      %644 = vmatpush.msra.mxu0 %v509
      %645 = vmatpush.msra.mxu0 %v508
      %646 = vmatpush.msra.mxu0 %v507
      %647 = vmatpush.msra.mxu0 %v506
      %648 = vmatpush.msra.mxu0 %v505
      %649 = vmatpush.msra.mxu0 %v504
      %650 = vmatpush.msra.mxu0 %v503
      %651 = vmatpush.msra.mxu0 %v502
      %652 = vmatpush.msra.mxu0 %v501
      %653 = vmatmul.f32.gmra.mxu0 %v463
      %v654 = vpop.f32.mrf.mxu0
      %v655 = vadd.f32 %v635, %v654
      %656 = vdwg.mxu0
      %657 = vmatpush.msra.mxu0 %v532
      %658 = vmatpush.msra.mxu0 %v531
      %659 = vmatpush.msra.mxu0 %v530
      %660 = vmatpush.msra.mxu0 %v529
      %661 = vmatpush.msra.mxu0 %v528
      %662 = vmatpush.msra.mxu0 %v527
      %663 = vmatpush.msra.mxu0 %v526
      %664 = vmatpush.msra.mxu0 %v525
      %665 = vmatpush.msra.mxu0 %v524
      %666 = vmatpush.msra.mxu0 %v523
      %667 = vmatpush.msra.mxu0 %v522
      %668 = vmatpush.msra.mxu0 %v521
      %669 = vmatpush.msra.mxu0 %v520
      %670 = vmatpush.msra.mxu0 %v519
      %671 = vmatpush.msra.mxu0 %v518
      %672 = vmatpush.msra.mxu0 %v517
      %673 = vmatmul.f32.gmra.mxu0 %v464
      %v674 = vpop.f32.mrf.mxu0
      %v675 = vadd.f32 %v655, %v674
      %676 = vdwg.mxu0
      %677 = vmatpush.msra.mxu0 %v548
      %678 = vmatpush.msra.mxu0 %v547
      %679 = vmatpush.msra.mxu0 %v546
      %680 = vmatpush.msra.mxu0 %v545
      %681 = vmatpush.msra.mxu0 %v544
      %682 = vmatpush.msra.mxu0 %v543
      %683 = vmatpush.msra.mxu0 %v542
      %684 = vmatpush.msra.mxu0 %v541
      %685 = vmatpush.msra.mxu0 %v540
      %686 = vmatpush.msra.mxu0 %v539
      %687 = vmatpush.msra.mxu0 %v538
      %688 = vmatpush.msra.mxu0 %v537
      %689 = vmatpush.msra.mxu0 %v536
      %690 = vmatpush.msra.mxu0 %v535
      %691 = vmatpush.msra.mxu0 %v534
      %692 = vmatpush.msra.mxu0 %v533
      %693 = vmatmul.f32.gmra.mxu0 %v465
      %v694 = vpop.f32.mrf.mxu0
      %v695 = vadd.f32 %v675, %v694
      %696 = vdwg.mxu0
      %697 = vmatpush.msra.mxu0 %v564
      %698 = vmatpush.msra.mxu0 %v563
      %699 = vmatpush.msra.mxu0 %v562
      %700 = vmatpush.msra.mxu0 %v561
      %701 = vmatpush.msra.mxu0 %v560
      %702 = vmatpush.msra.mxu0 %v559
      %703 = vmatpush.msra.mxu0 %v558
      %704 = vmatpush.msra.mxu0 %v557
      %705 = vmatpush.msra.mxu0 %v556
      %706 = vmatpush.msra.mxu0 %v555
      %707 = vmatpush.msra.mxu0 %v554
      %708 = vmatpush.msra.mxu0 %v553
      %709 = vmatpush.msra.mxu0 %v552
      %710 = vmatpush.msra.mxu0 %v551
      %711 = vmatpush.msra.mxu0 %v550
      %712 = vmatpush.msra.mxu0 %v549
      %713 = vmatmul.f32.gmra.mxu0 %v466
      %v714 = vpop.f32.mrf.mxu0
      %v715 = vadd.f32 %v695, %v714
      %716 = vdwg.mxu0
      %717 = vmatpush.msra.mxu0 %v580
      %718 = vmatpush.msra.mxu0 %v579
      %719 = vmatpush.msra.mxu0 %v578
      %720 = vmatpush.msra.mxu0 %v577
      %721 = vmatpush.msra.mxu0 %v576
      %722 = vmatpush.msra.mxu0 %v575
      %723 = vmatpush.msra.mxu0 %v574
      %724 = vmatpush.msra.mxu0 %v573
      %725 = vmatpush.msra.mxu0 %v572
      %726 = vmatpush.msra.mxu0 %v571
      %727 = vmatpush.msra.mxu0 %v570
      %728 = vmatpush.msra.mxu0 %v569
      %729 = vmatpush.msra.mxu0 %v568
      %730 = vmatpush.msra.mxu0 %v567
      %731 = vmatpush.msra.mxu0 %v566
      %732 = vmatpush.msra.mxu0 %v565
      %733 = vmatmul.f32.gmra.mxu0 %v467
      %v734 = vpop.f32.mrf.mxu0
      %v735 = vadd.f32 %v715, %v734
      %736 = vdwg.mxu0
      %737 = vmatpush.msra.mxu0 %v596
      %738 = vmatpush.msra.mxu0 %v595
      %739 = vmatpush.msra.mxu0 %v594
      %740 = vmatpush.msra.mxu0 %v593
      %741 = vmatpush.msra.mxu0 %v592
      %742 = vmatpush.msra.mxu0 %v591
      %743 = vmatpush.msra.mxu0 %v590
      %744 = vmatpush.msra.mxu0 %v589
      %745 = vmatpush.msra.mxu0 %v588
      %746 = vmatpush.msra.mxu0 %v587
      %747 = vmatpush.msra.mxu0 %v586
      %748 = vmatpush.msra.mxu0 %v585
      %749 = vmatpush.msra.mxu0 %v584
      %750 = vmatpush.msra.mxu0 %v583
      %751 = vmatpush.msra.mxu0 %v582
      %752 = vmatpush.msra.mxu0 %v581
      %753 = vmatmul.f32.gmra.mxu0 %v468
      %v754 = vpop.f32.mrf.mxu0
      %v755 = vadd.f32 %v735, %v754
      %756 = vdwg.mxu0
      %vm757 = vcmask 64512
      %758 = vst.msk [vmem:[%s219] sm:$0xff] %vm757, %v755
      %p759 = scmp.lt.s32.totalorder %s16, 1
      %s760 = scalar_select %p759, %s16, 1
      %s761 = smul.addr %s760, 8
      %s762 = scalar_lea.vmem %s5, %s761
      // Predicated region
      $region41: #{tpu_custom_call.1} parent=39 // pred_check
        %p763 = pneg %p144
      $region42: #{tpu_custom_call.1} parent=39 // pred_check_branch
        %765 = sbr.rel (%p763) target = $region44
      $region43: #{tpu_custom_call.1} parent=39 // pred_region
        _
      $region44: #{tpu_custom_call.1} parent=39 // pred_fallthru
        _
    $region40: #{tpu_custom_call.1} parent=5 // pred_fallthru
      _
    %p766 = scmp.le.s32.totalorder 2, %s11
    // Predicated region
    $region45: #{tpu_custom_call.1} parent=5 // pred_check
      %p767 = pneg %p766
    $region46: #{tpu_custom_call.1} parent=5 // pred_check_branch
      %769 = sbr.rel (%p767) target = $region48
    $region47: #{tpu_custom_call.1} parent=5 // pred_region
      %s770 = ssub.s32 %s11, 2
      // Predicated region
      $region49: #{tpu_custom_call.1} parent=47 // pred_check
        %p771 = pneg %p150
      $region50: #{tpu_custom_call.1} parent=47 // pred_check_branch
        %773 = sbr.rel (%p771) target = $region52
      $region51: #{tpu_custom_call.1} parent=47 // pred_region
        %p774 = scmp.lt.s32.totalorder %s17, 1
        %s775 = scalar_select %p774, %s17, 1
        %s776 = smul.addr %s775, 8
        %s777 = scalar_lea.vmem %s5, %s776
      $region52: #{tpu_custom_call.1} parent=47 // pred_fallthru
        _
    $region48: #{tpu_custom_call.1} parent=5 // pred_fallthru
      _
  $region6: #{tpu_custom_call.1} parent=0 // loop_footer
    %s15 = sadd.s32 1, %s11
  $region7: #{tpu_custom_call.1} parent=0 // loop_footer_branch
    %10 = sbr.rel target = $region3
  $region8: #{tpu_custom_call.1} parent=0 // loop_exit
    _

</llo_original>
